<compile_context>
chip_gen: v6e
topology: v6e:2x2x1
jax: 0.10.0
libtpu: 0.0.40
codegen_flags: <defaults>
</compile_context>

<pallas_src>
import functools

import jax
import jax.numpy as jnp
from jax.experimental import pallas as pl
from jax.experimental.pallas import tpu as pltpu


def dwconv_bn_kernel(x_ref, w_ref, gamma_ref, beta_ref, out_ref,
                     xp_ref, acc_ref, *, eps):
    # x_ref:     (N, H, W, Ct)          input channel-tile (full N, H, W)
    # w_ref:     (3, 3, Ct)             depthwise filter
    # gamma_ref, beta_ref: (1, 1, 1, Ct)
    # out_ref:   (N, H, W, Ct)
    # xp_ref:    (N, H+2, W+2, Ct) f32  zero-padded copy of x (VMEM scratch)
    # acc_ref:   (N, H, W, Ct)    f32   conv accumulator (VMEM scratch)
    N, H, W, Ct = x_ref.shape

    # ---- in-kernel zero padding: halo strips only (no full-scratch zeroing) --
    zrow = jnp.zeros((N, 1, W + 2, Ct), jnp.float32)
    zcol = jnp.zeros((N, H, 1, Ct), jnp.float32)
    xp_ref[:, 0:1, :, :] = zrow                       # top halo row
    xp_ref[:, H + 1:H + 2, :, :] = zrow               # bottom halo row
    xp_ref[:, 1:H + 1, 0:1, :] = zcol                 # left halo column
    xp_ref[:, 1:H + 1, W + 1:W + 2, :] = zcol         # right halo column
    xp_ref[:, 1:H + 1, 1:W + 1, :] = x_ref[...].astype(jnp.float32)

    w = w_ref[...].astype(jnp.float32)                # (3, 3, Ct)

    # ---- depthwise 3x3 conv: 9 shifted FMAs on the VPU ----------------------
    # Only the three kw-shifted windows cross the sublane tiling; read them
    # directly from the padded ref and reuse each one for all three kh rows
    # (kh shifts are cheap slices along the untiled H dimension).
    acc = None
    for kw in range(3):
        win = xp_ref[:, :, kw:kw + W, :]              # (N, H+2, W, Ct)
        for kh in range(3):
            tap = win[:, kh:kh + H] * w[kh, kw]
            acc = tap if acc is None else acc + tap
    acc_ref[...] = acc                                # explicit VMEM residency

    # ---- BatchNorm2d (training-mode batch stats over N,H,W; biased var) -----
    # Two-pass mean/variance for numerical robustness, fused scale/shift out.
    inv_cnt = 1.0 / float(N * H * W)
    mean = jnp.sum(acc_ref[...], axis=(0, 1, 2), keepdims=True) * inv_cnt
    cent = acc_ref[...] - mean
    var = jnp.sum(cent * cent, axis=(0, 1, 2), keepdims=True) * inv_cnt

    gamma = gamma_ref[...].astype(jnp.float32)
    beta = beta_ref[...].astype(jnp.float32)
    scale = gamma * jax.lax.rsqrt(var + eps)
    out_ref[...] = (cent * scale + beta).astype(out_ref.dtype)


def _tensorcores_per_chip():
    """v7x has 2 TensorCores per chip (target >= 2 parallel grid steps);
    v5e/v6e have 1 (target grid=(1,))."""
    try:
        kind = jax.devices()[0].device_kind.lower()
    except Exception:
        return 1
    return 2 if "v7" in kind else 1


def _pick_channel_tile(C, N, H, W):
    """Largest channel tile that divides C, fits a conservative VMEM budget,
    and yields at least one grid step per TensorCore."""
    def r8(v):
        return ((v + 7) // 8) * 8

    blk = N * H * r8(W) * 4                   # one f32 (N,H,W,.) buffer / channel
    xp = N * (H + 2) * r8(W + 2) * 4          # padded scratch / channel
    per_ch = 2 * 2 * blk + xp + blk           # in+out double-buffered + scratches
    budget = 12 * 1024 * 1024                 # below default scoped VMEM on all gens

    cands = [d for d in range(128, C + 1, 128) if C % d == 0]
    if C not in cands:
        cands.append(C)                       # full-C block is always legal
    cands = sorted(set(cands))

    fits = [d for d in cands if d * per_ch <= budget] or [cands[0]]
    n_cores = _tensorcores_per_chip()
    pref = [d for d in fits if C // d >= n_cores]
    return max(pref) if pref else max(fits)


def dwconv_bn_nhwc(x_nhwc, w_hwc, gamma, beta, *, eps=1e-3):
    """Fused depthwise-conv3x3 + BatchNorm.  x_nhwc: (N,H,W,C); w_hwc: (3,3,C);
    gamma/beta: (C,).  This is the transpose-free production entry point."""
    N, H, W, C = x_nhwc.shape
    g = gamma.reshape(1, 1, 1, C)
    b = beta.reshape(1, 1, 1, C)

    ct = _pick_channel_tile(C, N, H, W)
    grid = (C // ct,)

    nelem = N * H * W * C
    cost = pl.CostEstimate(
        flops=22 * nelem,                       # 17 conv + ~5 BN per element
        transcendentals=C,                      # one rsqrt per channel
        bytes_accessed=2 * 4 * nelem + 4 * 11 * C,
    )

    kernel = functools.partial(dwconv_bn_kernel, eps=eps)

    return pl.pallas_call(
        kernel,
        out_shape=jax.ShapeDtypeStruct((N, H, W, C), x_nhwc.dtype),
        grid_spec=pltpu.PrefetchScalarGridSpec(
            num_scalar_prefetch=0,
            grid=grid,
            in_specs=[
                pl.BlockSpec((N, H, W, ct), lambda c: (0, 0, 0, c)),
                pl.BlockSpec((3, 3, ct), lambda c: (0, 0, c)),
                pl.BlockSpec((1, 1, 1, ct), lambda c: (0, 0, 0, c)),
                pl.BlockSpec((1, 1, 1, ct), lambda c: (0, 0, 0, c)),
            ],
            out_specs=pl.BlockSpec((N, H, W, ct), lambda c: (0, 0, 0, c)),
            scratch_shapes=[
                pltpu.VMEM((N, H + 2, W + 2, ct), jnp.float32),
                pltpu.VMEM((N, H, W, ct), jnp.float32),
            ],
        ),
        compiler_params=pltpu.CompilerParams(
            # Channel tiles are fully independent (per-channel BN stats):
            # shard across TensorCores on v7x; harmless on v5e/v6e.
            dimension_semantics=("parallel",)),
        cost_estimate=cost,
    )(x_nhwc, w_hwc, g, b)


def dwconv_bn(x_nchw, weight, gamma, beta, *, eps=1e-3):
    """NCHW adapter matching the PyTorch module interface.

    x_nchw: (N, C, H, W); weight: (C, 1, 3, 3); gamma/beta: (C,).
    The transposes here are pure layout adaptation; production code should keep
    the model NHWC and call dwconv_bn_nhwc directly (no HBM round-trips)."""
    x_nhwc = jnp.transpose(x_nchw, (0, 2, 3, 1))
    w_hwc = jnp.transpose(weight[:, 0, :, :], (1, 2, 0))    # (3, 3, C)
    out_nhwc = dwconv_bn_nhwc(x_nhwc, w_hwc, gamma, beta, eps=eps)
    return jnp.transpose(out_nhwc, (0, 3, 1, 2))


def reference_nchw(x_nchw, weight, gamma, beta, eps=1e-3):
    # Pure-JAX reference: depthwise conv + training-mode BatchNorm.
    C = x_nchw.shape[1]
    y = jax.lax.conv_general_dilated(
        x_nchw, jnp.transpose(weight, (2, 3, 1, 0)),        # (3,3,1,C) HWIO
        window_strides=(1, 1), padding=((1, 1), (1, 1)),
        dimension_numbers=("NCHW", "HWIO", "NCHW"),
        feature_group_count=C,
        precision=jax.lax.Precision.HIGHEST)
    mean = jnp.mean(y, axis=(0, 2, 3), keepdims=True)
    var = jnp.mean((y - mean) ** 2, axis=(0, 2, 3), keepdims=True)
    return ((y - mean) * jax.lax.rsqrt(var + eps) * gamma.reshape(1, C, 1, 1)
            + beta.reshape(1, C, 1, 1))


# TODO(synk): BatchNorm2d running_mean/running_var momentum update (a training
# side effect of the PyTorch module) is not emitted; it does not affect the
# forward output, which uses batch statistics.

if __name__ == "__main__":
    # Small shapes consistent with the module (original: 1 x 2304 x 7 x 7,
    # depthwise).  C=256 -> grid=(1,) on v5e/v6e, grid=(2,) on v7x.
    N, C, H, W = 1, 256, 7, 7
    key = jax.random.PRNGKey(0)
    kx, kw_, kg, kb = jax.random.split(key, 4)

    x_nchw = jax.random.normal(kx, (N, C, H, W), dtype=jnp.float32)
    weight = jax.random.normal(kw_, (C, 1, 3, 3), dtype=jnp.float32) * 0.1
    gamma = 1.0 + 0.1 * jax.random.normal(kg, (C,), dtype=jnp.float32)
    beta = 0.1 * jax.random.normal(kb, (C,), dtype=jnp.float32)

    ref_nchw = reference_nchw(x_nchw, weight, gamma, beta)
    ref_nhwc = jnp.transpose(ref_nchw, (0, 2, 3, 1))

    # Preferred transpose-free path (model kept NHWC).
    x_nhwc = jnp.transpose(x_nchw, (0, 2, 3, 1))
    w_hwc = jnp.transpose(weight[:, 0, :, :], (1, 2, 0))
    out_nhwc = jax.block_until_ready(dwconv_bn_nhwc(x_nhwc, w_hwc, gamma, beta))
    assert out_nhwc.shape == (N, H, W, C)
    assert jnp.allclose(out_nhwc, ref_nhwc, atol=1e-3, rtol=1e-3), \
        "NHWC kernel mismatch vs reference"

    # PyTorch-interface (NCHW) adapter.
    out_nchw = jax.block_until_ready(dwconv_bn(x_nchw, weight, gamma, beta))
    assert out_nchw.shape == (N, C, H, W)
    assert jnp.allclose(out_nchw, ref_nchw, atol=1e-3, rtol=1e-3), \
        "NCHW adapter mismatch vs reference"

    print("KERNEL_OK")
</pallas_src>

<mosaic_0001>
module attributes {stable_mosaic.version = 11 : i64} {
  func.func @dwconv_bn_kernel(%arg0: i32, %arg1: memref<1x7x7x256xf32, #tpu.memory_space<vmem>>, %arg2: memref<3x3x256xf32, #tpu.memory_space<vmem>>, %arg3: memref<1x1x1x256xf32, #tpu.memory_space<vmem>>, %arg4: memref<1x1x1x256xf32, #tpu.memory_space<vmem>>, %arg5: memref<1x7x7x256xf32, #tpu.memory_space<vmem>>, %arg6: memref<1x9x9x256xf32, #tpu.memory_space<vmem>>, %arg7: memref<1x7x7x256xf32, #tpu.memory_space<vmem>>) attributes {dimension_semantics = [#tpu.dimension_semantics<parallel>], iteration_bounds = array<i64: 1>, scalar_prefetch = 0 : i64, scratch_operands = 2 : i64, tpu.core_type = #tpu.core_type<tc>, window_params = [{transform_indices = @transform_0, window_bounds = array<i64: 1, 7, 7, 256>}, {transform_indices = @transform_1, window_bounds = array<i64: 3, 3, 256>}, {transform_indices = @transform_2, window_bounds = array<i64: 1, 1, 1, 256>}, {transform_indices = @transform_3, window_bounds = array<i64: 1, 1, 1, 256>}, {transform_indices = @transform_4, window_bounds = array<i64: 1, 7, 7, 256>}]} {
    %cst = arith.constant 0.000000e+00 : f32
    %0 = vector.broadcast %cst : f32 to vector<1x1x9x256xf32>
    %cst_0 = arith.constant 0.000000e+00 : f32
    %1 = vector.broadcast %cst_0 : f32 to vector<1x7x1x256xf32>
    %c0 = arith.constant 0 : index
    %c0_1 = arith.constant 0 : index
    %c0_2 = arith.constant 0 : index
    %c0_3 = arith.constant 0 : index
    %2 = vector.load %arg6[%c0, %c0_1, %c0_2, %c0_3] : memref<1x9x9x256xf32, #tpu.memory_space<vmem>>, vector<1x1x9x256xf32>
    tpu.vector_store %arg6[%c0, %c0_1, %c0_2, %c0_3], %0 {strides = array<i32>} : memref<1x9x9x256xf32, #tpu.memory_space<vmem>>, vector<1x1x9x256xf32>,
    %c0_4 = arith.constant 0 : index
    %c8 = arith.constant 8 : index
    %c0_5 = arith.constant 0 : index
    %c0_6 = arith.constant 0 : index
    %3 = vector.load %arg6[%c0_4, %c8, %c0_5, %c0_6] : memref<1x9x9x256xf32, #tpu.memory_space<vmem>>, vector<1x1x9x256xf32>
    tpu.vector_store %arg6[%c0_4, %c8, %c0_5, %c0_6], %0 {strides = array<i32>} : memref<1x9x9x256xf32, #tpu.memory_space<vmem>>, vector<1x1x9x256xf32>,
    %c0_7 = arith.constant 0 : index
    %c1 = arith.constant 1 : index
    %c0_8 = arith.constant 0 : index
    %c0_9 = arith.constant 0 : index
    %4 = vector.load %arg6[%c0_7, %c1, %c0_8, %c0_9] : memref<1x9x9x256xf32, #tpu.memory_space<vmem>>, vector<1x7x1x256xf32>
    tpu.vector_store %arg6[%c0_7, %c1, %c0_8, %c0_9], %1 {strides = array<i32>} : memref<1x9x9x256xf32, #tpu.memory_space<vmem>>, vector<1x7x1x256xf32>,
    %c0_10 = arith.constant 0 : index
    %c1_11 = arith.constant 1 : index
    %c8_12 = arith.constant 8 : index
    %c0_13 = arith.constant 0 : index
    %5 = vector.load %arg6[%c0_10, %c1_11, %c8_12, %c0_13] : memref<1x9x9x256xf32, #tpu.memory_space<vmem>>, vector<1x7x1x256xf32>
    tpu.vector_store %arg6[%c0_10, %c1_11, %c8_12, %c0_13], %1 {strides = array<i32>} : memref<1x9x9x256xf32, #tpu.memory_space<vmem>>, vector<1x7x1x256xf32>,
    %c0_14 = arith.constant 0 : index
    %c0_15 = arith.constant 0 : index
    %c0_16 = arith.constant 0 : index
    %c0_17 = arith.constant 0 : index
    %6 = vector.load %arg1[%c0_14, %c0_15, %c0_16, %c0_17] : memref<1x7x7x256xf32, #tpu.memory_space<vmem>>, vector<1x7x7x256xf32>
    %c0_18 = arith.constant 0 : index
    %c1_19 = arith.constant 1 : index
    %c1_20 = arith.constant 1 : index
    %c0_21 = arith.constant 0 : index
    %7 = vector.load %arg6[%c0_18, %c1_19, %c1_20, %c0_21] : memref<1x9x9x256xf32, #tpu.memory_space<vmem>>, vector<1x7x7x256xf32>
    tpu.vector_store %arg6[%c0_18, %c1_19, %c1_20, %c0_21], %6 {strides = array<i32>} : memref<1x9x9x256xf32, #tpu.memory_space<vmem>>, vector<1x7x7x256xf32>,
    %c0_22 = arith.constant 0 : index
    %c0_23 = arith.constant 0 : index
    %c0_24 = arith.constant 0 : index
    %8 = vector.load %arg2[%c0_22, %c0_23, %c0_24] : memref<3x3x256xf32, #tpu.memory_space<vmem>>, vector<3x3x256xf32>
    %c0_25 = arith.constant 0 : index
    %c0_26 = arith.constant 0 : index
    %c0_27 = arith.constant 0 : index
    %c0_28 = arith.constant 0 : index
    %9 = vector.load %arg6[%c0_25, %c0_26, %c0_27, %c0_28] : memref<1x9x9x256xf32, #tpu.memory_space<vmem>>, vector<1x9x7x256xf32>
    %10 = vector.extract_strided_slice %9 {offsets = [0, 0, 0, 0], sizes = [1, 7, 7, 256], strides = [1, 1, 1, 1]} : vector<1x9x7x256xf32> to vector<1x7x7x256xf32>
    %11 = vector.extract_strided_slice %8 {offsets = [0, 0, 0], sizes = [1, 1, 256], strides = [1, 1, 1]} : vector<3x3x256xf32> to vector<1x1x256xf32>
    %12 = vector.shape_cast %11 : vector<1x1x256xf32> to vector<256xf32>
    %13 = vector.shape_cast %12 : vector<256xf32> to vector<1x1x1x256xf32>
    %14 = vector.broadcast %13 : vector<1x1x1x256xf32> to vector<1x7x7x256xf32>
    %15 = arith.mulf %10, %14 : vector<1x7x7x256xf32>
    %16 = vector.extract_strided_slice %9 {offsets = [0, 1, 0, 0], sizes = [1, 7, 7, 256], strides = [1, 1, 1, 1]} : vector<1x9x7x256xf32> to vector<1x7x7x256xf32>
    %17 = vector.extract_strided_slice %8 {offsets = [1, 0, 0], sizes = [1, 1, 256], strides = [1, 1, 1]} : vector<3x3x256xf32> to vector<1x1x256xf32>
    %18 = vector.shape_cast %17 : vector<1x1x256xf32> to vector<256xf32>
    %19 = vector.shape_cast %18 : vector<256xf32> to vector<1x1x1x256xf32>
    %20 = vector.broadcast %19 : vector<1x1x1x256xf32> to vector<1x7x7x256xf32>
    %21 = arith.mulf %16, %20 : vector<1x7x7x256xf32>
    %22 = arith.addf %15, %21 : vector<1x7x7x256xf32>
    %23 = vector.extract_strided_slice %9 {offsets = [0, 2, 0, 0], sizes = [1, 7, 7, 256], strides = [1, 1, 1, 1]} : vector<1x9x7x256xf32> to vector<1x7x7x256xf32>
    %24 = vector.extract_strided_slice %8 {offsets = [2, 0, 0], sizes = [1, 1, 256], strides = [1, 1, 1]} : vector<3x3x256xf32> to vector<1x1x256xf32>
    %25 = vector.shape_cast %24 : vector<1x1x256xf32> to vector<256xf32>
    %26 = vector.shape_cast %25 : vector<256xf32> to vector<1x1x1x256xf32>
    %27 = vector.broadcast %26 : vector<1x1x1x256xf32> to vector<1x7x7x256xf32>
    %28 = arith.mulf %23, %27 : vector<1x7x7x256xf32>
    %29 = arith.addf %22, %28 : vector<1x7x7x256xf32>
    %c0_29 = arith.constant 0 : index
    %c0_30 = arith.constant 0 : index
    %c1_31 = arith.constant 1 : index
    %c0_32 = arith.constant 0 : index
    %30 = vector.load %arg6[%c0_29, %c0_30, %c1_31, %c0_32] : memref<1x9x9x256xf32, #tpu.memory_space<vmem>>, vector<1x9x7x256xf32>
    %31 = vector.extract_strided_slice %30 {offsets = [0, 0, 0, 0], sizes = [1, 7, 7, 256], strides = [1, 1, 1, 1]} : vector<1x9x7x256xf32> to vector<1x7x7x256xf32>
    %32 = vector.extract_strided_slice %8 {offsets = [0, 1, 0], sizes = [1, 1, 256], strides = [1, 1, 1]} : vector<3x3x256xf32> to vector<1x1x256xf32>
    %33 = vector.shape_cast %32 : vector<1x1x256xf32> to vector<256xf32>
    %34 = vector.shape_cast %33 : vector<256xf32> to vector<1x1x1x256xf32>
    %35 = vector.broadcast %34 : vector<1x1x1x256xf32> to vector<1x7x7x256xf32>
    %36 = arith.mulf %31, %35 : vector<1x7x7x256xf32>
    %37 = arith.addf %29, %36 : vector<1x7x7x256xf32>
    %38 = vector.extract_strided_slice %30 {offsets = [0, 1, 0, 0], sizes = [1, 7, 7, 256], strides = [1, 1, 1, 1]} : vector<1x9x7x256xf32> to vector<1x7x7x256xf32>
    %39 = vector.extract_strided_slice %8 {offsets = [1, 1, 0], sizes = [1, 1, 256], strides = [1, 1, 1]} : vector<3x3x256xf32> to vector<1x1x256xf32>
    %40 = vector.shape_cast %39 : vector<1x1x256xf32> to vector<256xf32>
    %41 = vector.shape_cast %40 : vector<256xf32> to vector<1x1x1x256xf32>
    %42 = vector.broadcast %41 : vector<1x1x1x256xf32> to vector<1x7x7x256xf32>
    %43 = arith.mulf %38, %42 : vector<1x7x7x256xf32>
    %44 = arith.addf %37, %43 : vector<1x7x7x256xf32>
    %45 = vector.extract_strided_slice %30 {offsets = [0, 2, 0, 0], sizes = [1, 7, 7, 256], strides = [1, 1, 1, 1]} : vector<1x9x7x256xf32> to vector<1x7x7x256xf32>
    %46 = vector.extract_strided_slice %8 {offsets = [2, 1, 0], sizes = [1, 1, 256], strides = [1, 1, 1]} : vector<3x3x256xf32> to vector<1x1x256xf32>
    %47 = vector.shape_cast %46 : vector<1x1x256xf32> to vector<256xf32>
    %48 = vector.shape_cast %47 : vector<256xf32> to vector<1x1x1x256xf32>
    %49 = vector.broadcast %48 : vector<1x1x1x256xf32> to vector<1x7x7x256xf32>
    %50 = arith.mulf %45, %49 : vector<1x7x7x256xf32>
    %51 = arith.addf %44, %50 : vector<1x7x7x256xf32>
    %c0_33 = arith.constant 0 : index
    %c0_34 = arith.constant 0 : index
    %c2 = arith.constant 2 : index
    %c0_35 = arith.constant 0 : index
    %52 = vector.load %arg6[%c0_33, %c0_34, %c2, %c0_35] : memref<1x9x9x256xf32, #tpu.memory_space<vmem>>, vector<1x9x7x256xf32>
    %53 = vector.extract_strided_slice %52 {offsets = [0, 0, 0, 0], sizes = [1, 7, 7, 256], strides = [1, 1, 1, 1]} : vector<1x9x7x256xf32> to vector<1x7x7x256xf32>
    %54 = vector.extract_strided_slice %8 {offsets = [0, 2, 0], sizes = [1, 1, 256], strides = [1, 1, 1]} : vector<3x3x256xf32> to vector<1x1x256xf32>
    %55 = vector.shape_cast %54 : vector<1x1x256xf32> to vector<256xf32>
    %56 = vector.shape_cast %55 : vector<256xf32> to vector<1x1x1x256xf32>
    %57 = vector.broadcast %56 : vector<1x1x1x256xf32> to vector<1x7x7x256xf32>
    %58 = arith.mulf %53, %57 : vector<1x7x7x256xf32>
    %59 = arith.addf %51, %58 : vector<1x7x7x256xf32>
    %60 = vector.extract_strided_slice %52 {offsets = [0, 1, 0, 0], sizes = [1, 7, 7, 256], strides = [1, 1, 1, 1]} : vector<1x9x7x256xf32> to vector<1x7x7x256xf32>
    %61 = vector.extract_strided_slice %8 {offsets = [1, 2, 0], sizes = [1, 1, 256], strides = [1, 1, 1]} : vector<3x3x256xf32> to vector<1x1x256xf32>
    %62 = vector.shape_cast %61 : vector<1x1x256xf32> to vector<256xf32>
    %63 = vector.shape_cast %62 : vector<256xf32> to vector<1x1x1x256xf32>
    %64 = vector.broadcast %63 : vector<1x1x1x256xf32> to vector<1x7x7x256xf32>
    %65 = arith.mulf %60, %64 : vector<1x7x7x256xf32>
    %66 = arith.addf %59, %65 : vector<1x7x7x256xf32>
    %67 = vector.extract_strided_slice %52 {offsets = [0, 2, 0, 0], sizes = [1, 7, 7, 256], strides = [1, 1, 1, 1]} : vector<1x9x7x256xf32> to vector<1x7x7x256xf32>
    %68 = vector.extract_strided_slice %8 {offsets = [2, 2, 0], sizes = [1, 1, 256], strides = [1, 1, 1]} : vector<3x3x256xf32> to vector<1x1x256xf32>
    %69 = vector.shape_cast %68 : vector<1x1x256xf32> to vector<256xf32>
    %70 = vector.shape_cast %69 : vector<256xf32> to vector<1x1x1x256xf32>
    %71 = vector.broadcast %70 : vector<1x1x1x256xf32> to vector<1x7x7x256xf32>
    %72 = arith.mulf %67, %71 : vector<1x7x7x256xf32>
    %73 = arith.addf %66, %72 : vector<1x7x7x256xf32>
    %c0_36 = arith.constant 0 : index
    %c0_37 = arith.constant 0 : index
    %c0_38 = arith.constant 0 : index
    %c0_39 = arith.constant 0 : index
    %74 = vector.load %arg7[%c0_36, %c0_37, %c0_38, %c0_39] : memref<1x7x7x256xf32, #tpu.memory_space<vmem>>, vector<1x7x7x256xf32>
    tpu.vector_store %arg7[%c0_36, %c0_37, %c0_38, %c0_39], %73 {strides = array<i32>} : memref<1x7x7x256xf32, #tpu.memory_space<vmem>>, vector<1x7x7x256xf32>,
    %c0_40 = arith.constant 0 : index
    %c0_41 = arith.constant 0 : index
    %c0_42 = arith.constant 0 : index
    %c0_43 = arith.constant 0 : index
    %75 = vector.load %arg7[%c0_40, %c0_41, %c0_42, %c0_43] : memref<1x7x7x256xf32, #tpu.memory_space<vmem>>, vector<1x7x7x256xf32>
    %cst_44 = arith.constant dense<0.000000e+00> : vector<256xf32>
    %76 = vector.multi_reduction <add>, %75, %cst_44 [0, 1, 2] : vector<1x7x7x256xf32> to vector<256xf32>
    %77 = vector.shape_cast %76 : vector<256xf32> to vector<1x1x1x256xf32>
    %cst_45 = arith.constant 0.0204081628 : f32
    %78 = vector.broadcast %cst_45 : f32 to vector<1x1x1x256xf32>
    %79 = arith.mulf %77, %78 : vector<1x1x1x256xf32>
    %c0_46 = arith.constant 0 : index
    %c0_47 = arith.constant 0 : index
    %c0_48 = arith.constant 0 : index
    %c0_49 = arith.constant 0 : index
    %80 = vector.load %arg7[%c0_46, %c0_47, %c0_48, %c0_49] : memref<1x7x7x256xf32, #tpu.memory_space<vmem>>, vector<1x7x7x256xf32>
    %81 = vector.broadcast %79 : vector<1x1x1x256xf32> to vector<1x7x7x256xf32>
    %82 = arith.subf %80, %81 : vector<1x7x7x256xf32>
    %83 = arith.mulf %82, %82 : vector<1x7x7x256xf32>
    %cst_50 = arith.constant dense<0.000000e+00> : vector<256xf32>
    %84 = vector.multi_reduction <add>, %83, %cst_50 [0, 1, 2] : vector<1x7x7x256xf32> to vector<256xf32>
    %85 = vector.shape_cast %84 : vector<256xf32> to vector<1x1x1x256xf32>
    %cst_51 = arith.constant 0.0204081628 : f32
    %86 = vector.broadcast %cst_51 : f32 to vector<1x1x1x256xf32>
    %87 = arith.mulf %85, %86 : vector<1x1x1x256xf32>
    %c0_52 = arith.constant 0 : index
    %c0_53 = arith.constant 0 : index
    %c0_54 = arith.constant 0 : index
    %c0_55 = arith.constant 0 : index
    %88 = vector.load %arg3[%c0_52, %c0_53, %c0_54, %c0_55] : memref<1x1x1x256xf32, #tpu.memory_space<vmem>>, vector<1x1x1x256xf32>
    %c0_56 = arith.constant 0 : index
    %c0_57 = arith.constant 0 : index
    %c0_58 = arith.constant 0 : index
    %c0_59 = arith.constant 0 : index
    %89 = vector.load %arg4[%c0_56, %c0_57, %c0_58, %c0_59] : memref<1x1x1x256xf32, #tpu.memory_space<vmem>>, vector<1x1x1x256xf32>
    %cst_60 = arith.constant 1.000000e-03 : f32
    %90 = vector.broadcast %cst_60 : f32 to vector<1x1x1x256xf32>
    %91 = arith.addf %87, %90 : vector<1x1x1x256xf32>
    %92 = math.rsqrt %91 : vector<1x1x1x256xf32>
    %93 = arith.mulf %88, %92 : vector<1x1x1x256xf32>
    %94 = vector.broadcast %93 : vector<1x1x1x256xf32> to vector<1x7x7x256xf32>
    %95 = arith.mulf %82, %94 : vector<1x7x7x256xf32>
    %96 = vector.broadcast %89 : vector<1x1x1x256xf32> to vector<1x7x7x256xf32>
    %97 = arith.addf %95, %96 : vector<1x7x7x256xf32>
    %c0_61 = arith.constant 0 : index
    %c0_62 = arith.constant 0 : index
    %c0_63 = arith.constant 0 : index
    %c0_64 = arith.constant 0 : index
    %98 = vector.load %arg5[%c0_61, %c0_62, %c0_63, %c0_64] : memref<1x7x7x256xf32, #tpu.memory_space<vmem>>, vector<1x7x7x256xf32>
    tpu.vector_store %arg5[%c0_61, %c0_62, %c0_63, %c0_64], %97 {strides = array<i32>} : memref<1x7x7x256xf32, #tpu.memory_space<vmem>>, vector<1x7x7x256xf32>,
    return
  }
  func.func @transform_0(%arg0: i32) -> (i32, i32, i32, i32) {
    %c0_i32 = arith.constant 0 : i32
    %c0_i32_0 = arith.constant 0 : i32
    %c0_i32_1 = arith.constant 0 : i32
    %c0_i32_2 = arith.constant 0 : i32
    return %c0_i32, %c0_i32_0, %c0_i32_1, %arg0 : i32, i32, i32, i32
  }
  func.func @transform_1(%arg0: i32) -> (i32, i32, i32) {
    %c0_i32 = arith.constant 0 : i32
    %c0_i32_0 = arith.constant 0 : i32
    %c0_i32_1 = arith.constant 0 : i32
    return %c0_i32, %c0_i32_0, %arg0 : i32, i32, i32
  }
  func.func @transform_2(%arg0: i32) -> (i32, i32, i32, i32) {
    %c0_i32 = arith.constant 0 : i32
    %c0_i32_0 = arith.constant 0 : i32
    %c0_i32_1 = arith.constant 0 : i32
    %c0_i32_2 = arith.constant 0 : i32
    return %c0_i32, %c0_i32_0, %c0_i32_1, %arg0 : i32, i32, i32, i32
  }
  func.func @transform_3(%arg0: i32) -> (i32, i32, i32, i32) {
    %c0_i32 = arith.constant 0 : i32
    %c0_i32_0 = arith.constant 0 : i32
    %c0_i32_1 = arith.constant 0 : i32
    %c0_i32_2 = arith.constant 0 : i32
    return %c0_i32, %c0_i32_0, %c0_i32_1, %arg0 : i32, i32, i32, i32
  }
  func.func @transform_4(%arg0: i32) -> (i32, i32, i32, i32) {
    %c0_i32 = arith.constant 0 : i32
    %c0_i32_0 = arith.constant 0 : i32
    %c0_i32_1 = arith.constant 0 : i32
    %c0_i32_2 = arith.constant 0 : i32
    return %c0_i32, %c0_i32_0, %c0_i32_1, %arg0 : i32, i32, i32, i32
  }
}

</mosaic_0001>

<llo_original>
// kernel: tpu_custom_call.1
$region0: #{tpu_custom_call.1}
  #allocation0 [shape = 'u32[]', space=smem, size = 0x4, offset = 0x4, fixed_abs, tag = 'smem constant byte address 0x4 - core index']
  #allocation1 [shape = 'u32[144,128]{1,0:T(1,128)}', space=vmem, size = 0x12000, scoped, tag = 'internal scratch']
  #allocation2 [shape = 'f32[1,9,9,256]{3,2,1,0:T(8,128)}', space=vmem, size = 0x24000, scoped, tag = 'scratch operand']
  #allocation3 [shape = 'f32[1,7,7,256]{3,2,1,0:T(8,128)}', space=vmem, size = 0xe000, scoped, tag = 'scratch operand']
  %s0 = inlined_call_operand.vmem [shape: f32[1,7,7,256], index: 0, kind: input, shape index: {}]
  %s1 = inlined_call_operand.vmem [shape: f32[3,3,256], index: 1, kind: input, shape index: {}]
  %s2 = inlined_call_operand.vmem [shape: f32[1,1,1,256], index: 2, kind: input, shape index: {}]
  %s3 = inlined_call_operand.vmem [shape: f32[1,1,1,256], index: 3, kind: input, shape index: {}]
  %s4 = inlined_call_operand.vmem [shape: f32[1,7,7,256], index: 4, kind: output, shape index: {}]
  %s5 = sld [smem:[#allocation0]]
  $region26: #{tpu_custom_call.1} parent=0
    _
  %s7 = ssub.s32 1, %s5
  %s8 = scalar_select 0, %s7, %s5
  // Predicated region
  $region2: #{tpu_custom_call.1} parent=0 // pred_check
    _
  $region3: #{tpu_custom_call.1} parent=0 // pred_check_branch
    %10 = sbr.rel (0) target = $region5
  $region4: #{tpu_custom_call.1} parent=0 // pred_region
    _
  $region5: #{tpu_custom_call.1} parent=0 // pred_fallthru
    _
  // Predicated region
  $region6: #{tpu_custom_call.1} parent=0 // pred_check
    _
  $region7: #{tpu_custom_call.1} parent=0 // pred_check_branch
    %12 = sbr.rel (0) target = $region9
  $region8: #{tpu_custom_call.1} parent=0 // pred_region
    _
  $region9: #{tpu_custom_call.1} parent=0 // pred_fallthru
    _
  // Predicated region
  $region10: #{tpu_custom_call.1} parent=0 // pred_check
    _
  $region11: #{tpu_custom_call.1} parent=0 // pred_check_branch
    %14 = sbr.rel (0) target = $region13
  $region12: #{tpu_custom_call.1} parent=0 // pred_region
    _
  $region13: #{tpu_custom_call.1} parent=0 // pred_fallthru
    _
  // Predicated region
  $region14: #{tpu_custom_call.1} parent=0 // pred_check
    _
  $region15: #{tpu_custom_call.1} parent=0 // pred_check_branch
    %16 = sbr.rel (0) target = $region17
  $region16: #{tpu_custom_call.1} parent=0 // pred_region
    _
  $region17: #{tpu_custom_call.1} parent=0 // pred_fallthru
    _
  %17 = vst [vmem:[#allocation2] sm:$0xff] 0.0
  %18 = vst [vmem:[#allocation2 + $0x8] sm:$0xff] 0.0
  %19 = vst [vmem:[#allocation2 + $0x10] sm:$0x1] 0.0
  %20 = vst [vmem:[#allocation2 + $0x18] sm:$0x1] 0.0
  %s21 = scalar_lea.vmem [#allocation2], 256
  %22 = vst [vmem:[%s21] sm:$0xff] 0.0
  %23 = vst [vmem:[%s21 + $0x8] sm:$0xff] 0.0
  %24 = vst [vmem:[%s21 + $0x10] sm:$0x1] 0.0
  %25 = vst [vmem:[%s21 + $0x18] sm:$0x1] 0.0
  %s26 = scalar_lea.vmem [#allocation2], 32
  %v27 = vlaneseq
  %vm28 = vcmp.ge.s32.totalorder %v27, 0
  %vm29 = vcmp.lt.s32.totalorder %v27, 256
  %vm30 = vmand %vm28, %vm29
  %31 = vst.msk [vmem:[%s26] ss:$8 sm:$0x3] %vm30, 0.0
  %32 = vst.msk [vmem:[%s26] ss:$8 sm:$0x0] %vm30, 0.0
  %s33 = scalar_lea.vmem %s26, 32 [#allocation2]
  %34 = vst.msk [vmem:[%s33] ss:$8 sm:$0x3] %vm30, 0.0
  %35 = vst.msk [vmem:[%s33] ss:$8 sm:$0x0] %vm30, 0.0
  %s36 = scalar_lea.vmem %s26, 64 [#allocation2]
  %37 = vst.msk [vmem:[%s36] ss:$8 sm:$0x3] %vm30, 0.0
  %38 = vst.msk [vmem:[%s36] ss:$8 sm:$0x0] %vm30, 0.0
  %s39 = scalar_lea.vmem %s26, 96 [#allocation2]
  %40 = vst.msk [vmem:[%s39] ss:$8 sm:$0x3] %vm30, 0.0
  %41 = vst.msk [vmem:[%s39] ss:$8 sm:$0x0] %vm30, 0.0
  %s42 = scalar_lea.vmem %s26, 128 [#allocation2]
  %43 = vst.msk [vmem:[%s42] ss:$8 sm:$0x3] %vm30, 0.0
  %44 = vst.msk [vmem:[%s42] ss:$8 sm:$0x0] %vm30, 0.0
  %s45 = scalar_lea.vmem %s26, 160 [#allocation2]
  %46 = vst.msk [vmem:[%s45] ss:$8 sm:$0x3] %vm30, 0.0
  %47 = vst.msk [vmem:[%s45] ss:$8 sm:$0x0] %vm30, 0.0
  %s48 = scalar_lea.vmem %s26, 192 [#allocation2]
  %49 = vst.msk [vmem:[%s48] ss:$8 sm:$0x3] %vm30, 0.0
  %50 = vst.msk [vmem:[%s48] ss:$8 sm:$0x0] %vm30, 0.0
  %s51 = scalar_lea.vmem %s26, 16 [#allocation2]
  %52 = vst.msk [vmem:[%s51] ss:$8 sm:$0x3] %vm30, 0.0
  %53 = vst.msk [vmem:[%s51] ss:$8 sm:$0x0] %vm30, 0.0
  %s54 = scalar_lea.vmem %s26, 48 [#allocation2]
  %55 = vst.msk [vmem:[%s54] ss:$8 sm:$0x3] %vm30, 0.0
  %56 = vst.msk [vmem:[%s54] ss:$8 sm:$0x0] %vm30, 0.0
  %s57 = scalar_lea.vmem %s26, 80 [#allocation2]
  %58 = vst.msk [vmem:[%s57] ss:$8 sm:$0x3] %vm30, 0.0
  %59 = vst.msk [vmem:[%s57] ss:$8 sm:$0x0] %vm30, 0.0
  %s60 = scalar_lea.vmem %s26, 112 [#allocation2]
  %61 = vst.msk [vmem:[%s60] ss:$8 sm:$0x3] %vm30, 0.0
  %62 = vst.msk [vmem:[%s60] ss:$8 sm:$0x0] %vm30, 0.0
  %s63 = scalar_lea.vmem %s26, 144 [#allocation2]
  %64 = vst.msk [vmem:[%s63] ss:$8 sm:$0x3] %vm30, 0.0
  %65 = vst.msk [vmem:[%s63] ss:$8 sm:$0x0] %vm30, 0.0
  %s66 = scalar_lea.vmem %s26, 176 [#allocation2]
  %67 = vst.msk [vmem:[%s66] ss:$8 sm:$0x3] %vm30, 0.0
  %68 = vst.msk [vmem:[%s66] ss:$8 sm:$0x0] %vm30, 0.0
  %s69 = scalar_lea.vmem %s26, 208 [#allocation2]
  %70 = vst.msk [vmem:[%s69] ss:$8 sm:$0x3] %vm30, 0.0
  %71 = vst.msk [vmem:[%s69] ss:$8 sm:$0x0] %vm30, 0.0
  %v72 = vld [vmem:[%s0] sm:$0x7f]
  %v73 = vld [vmem:[%s0 + $0x8] sm:$0x7f]
  %v74 = vld [vmem:[%s0 + $0x10] sm:$0x7f]
  %v75 = vld [vmem:[%s0 + $0x18] sm:$0x7f]
  %v76 = vld [vmem:[%s0 + $0x20] sm:$0x7f]
  %v77 = vld [vmem:[%s0 + $0x28] sm:$0x7f]
  %v78 = vld [vmem:[%s0 + $0x30] sm:$0x7f]
  %v79 = vld [vmem:[%s0 + $0x38] sm:$0x7f]
  %v80 = vld [vmem:[%s0 + $0x40] sm:$0x7f]
  %v81 = vld [vmem:[%s0 + $0x48] sm:$0x7f]
  %v82 = vld [vmem:[%s0 + $0x50] sm:$0x7f]
  %v83 = vld [vmem:[%s0 + $0x58] sm:$0x7f]
  %v84 = vld [vmem:[%s0 + $0x60] sm:$0x7f]
  %v85 = vld [vmem:[%s0 + $0x68] sm:$0x7f]
  %v100 = vrot.slane %v72, 7
  %v101 = vrot.slane %v73, 7
  %v102 = vrot.slane %v74, 7
  %v103 = vrot.slane %v75, 7
  %v104 = vrot.slane %v76, 7
  %v105 = vrot.slane %v77, 7
  %v106 = vrot.slane %v78, 7
  %v107 = vrot.slane %v79, 7
  %v108 = vrot.slane %v80, 7
  %v109 = vrot.slane %v81, 7
  %v110 = vrot.slane %v82, 7
  %v111 = vrot.slane %v83, 7
  %v112 = vrot.slane %v84, 7
  %v113 = vrot.slane %v85, 7
  %128 = vst [vmem:[%s26] sm:$0xfe] %v100
  %129 = vst [vmem:[%s26 + $0x8] sm:$0xfe] %v101
  %130 = vst [vmem:[%s26 + $0x20] sm:$0xfe] %v102
  %131 = vst [vmem:[%s26 + $0x28] sm:$0xfe] %v103
  %132 = vst [vmem:[%s26 + $0x40] sm:$0xfe] %v104
  %133 = vst [vmem:[%s26 + $0x48] sm:$0xfe] %v105
  %134 = vst [vmem:[%s26 + $0x60] sm:$0xfe] %v106
  %135 = vst [vmem:[%s26 + $0x68] sm:$0xfe] %v107
  %136 = vst [vmem:[%s26 + $0x80] sm:$0xfe] %v108
  %137 = vst [vmem:[%s26 + $0x88] sm:$0xfe] %v109
  %138 = vst [vmem:[%s26 + $0xa0] sm:$0xfe] %v110
  %139 = vst [vmem:[%s26 + $0xa8] sm:$0xfe] %v111
  %140 = vst [vmem:[%s26 + $0xc0] sm:$0xfe] %v112
  %141 = vst [vmem:[%s26 + $0xc8] sm:$0xfe] %v113
  %v142 = vld [vmem:[%s1] sm:$0x77]
  %v143 = vld [vmem:[%s1 + $0x8] sm:$0x77]
  %v144 = vld [vmem:[%s1 + $0x10] sm:$0x77]
  %v145 = vld [vmem:[#allocation2] sm:$0x7f]
  %v146 = vld [vmem:[#allocation2 + $0x8] sm:$0x7f]
  %v147 = vld [vmem:[#allocation2 + $0x20] sm:$0x7f]
  %v148 = vld [vmem:[#allocation2 + $0x28] sm:$0x7f]
  %v149 = vld [vmem:[#allocation2 + $0x40] sm:$0x7f]
  %v150 = vld [vmem:[#allocation2 + $0x48] sm:$0x7f]
  %v151 = vld [vmem:[#allocation2 + $0x60] sm:$0x7f]
  %v152 = vld [vmem:[#allocation2 + $0x68] sm:$0x7f]
  %v153 = vld [vmem:[#allocation2 + $0x80] sm:$0x7f]
  %v154 = vld [vmem:[#allocation2 + $0x88] sm:$0x7f]
  %v155 = vld [vmem:[#allocation2 + $0xa0] sm:$0x7f]
  %v156 = vld [vmem:[#allocation2 + $0xa8] sm:$0x7f]
  %v157 = vld [vmem:[#allocation2 + $0xc0] sm:$0x7f]
  %v158 = vld [vmem:[#allocation2 + $0xc8] sm:$0x7f]
  %v159 = vld [vmem:[#allocation2 + $0xe0] sm:$0x7f]
  %v160 = vld [vmem:[#allocation2 + $0xe8] sm:$0x7f]
  %v161 = vld [vmem:[#allocation2 + $0x100] sm:$0x7f]
  %v162 = vld [vmem:[#allocation2 + $0x108] sm:$0x7f]
  %v164 = vlaneseq
  %v165 = vshrl.u32 %v164, 7
  %v166 = vsub.s32 0, %v165
  %v167 = vrot.slane %v142, %v166
  %v168 = vlaneseq
  %v169 = vshrl.u32 %v168, 7
  %v170 = vsub.s32 4, %v169
  %v171 = vrot.slane %v142, %v170
  %v174 = vlaneseq
  %v175 = vshrl.u32 %v174, 7
  %v176 = vsub.s32 0, %v175
  %v177 = vrot.slane %v167, %v176
  %v178 = vlaneseq
  %v179 = vshrl.u32 %v178, 7
  %v180 = vsub.s32 0, %v179
  %v181 = vrot.slane %v171, %v180
  %v182 = vmul.f32 %v145, %v177
  %v183 = vmul.f32 %v146, %v181
  %v184 = vmul.f32 %v147, %v177
  %v185 = vmul.f32 %v148, %v181
  %v186 = vmul.f32 %v149, %v177
  %v187 = vmul.f32 %v150, %v181
  %v188 = vmul.f32 %v151, %v177
  %v189 = vmul.f32 %v152, %v181
  %v190 = vmul.f32 %v153, %v177
  %v191 = vmul.f32 %v154, %v181
  %v192 = vmul.f32 %v155, %v177
  %v193 = vmul.f32 %v156, %v181
  %v194 = vmul.f32 %v157, %v177
  %v195 = vmul.f32 %v158, %v181
  %v197 = vlaneseq
  %v198 = vshrl.u32 %v197, 7
  %v199 = vsub.s32 0, %v198
  %v200 = vrot.slane %v143, %v199
  %v201 = vlaneseq
  %v202 = vshrl.u32 %v201, 7
  %v203 = vsub.s32 4, %v202
  %v204 = vrot.slane %v143, %v203
  %v207 = vlaneseq
  %v208 = vshrl.u32 %v207, 7
  %v209 = vsub.s32 0, %v208
  %v210 = vrot.slane %v200, %v209
  %v211 = vlaneseq
  %v212 = vshrl.u32 %v211, 7
  %v213 = vsub.s32 0, %v212
  %v214 = vrot.slane %v204, %v213
  %v215 = vmul.f32 %v147, %v210
  %v216 = vmul.f32 %v148, %v214
  %v217 = vmul.f32 %v149, %v210
  %v218 = vmul.f32 %v150, %v214
  %v219 = vmul.f32 %v151, %v210
  %v220 = vmul.f32 %v152, %v214
  %v221 = vmul.f32 %v153, %v210
  %v222 = vmul.f32 %v154, %v214
  %v223 = vmul.f32 %v155, %v210
  %v224 = vmul.f32 %v156, %v214
  %v225 = vmul.f32 %v157, %v210
  %v226 = vmul.f32 %v158, %v214
  %v227 = vmul.f32 %v159, %v210
  %v228 = vmul.f32 %v160, %v214
  %v229 = vadd.f32 %v182, %v215
  %v230 = vadd.f32 %v183, %v216
  %v231 = vadd.f32 %v184, %v217
  %v232 = vadd.f32 %v185, %v218
  %v233 = vadd.f32 %v186, %v219
  %v234 = vadd.f32 %v187, %v220
  %v235 = vadd.f32 %v188, %v221
  %v236 = vadd.f32 %v189, %v222
  %v237 = vadd.f32 %v190, %v223
  %v238 = vadd.f32 %v191, %v224
  %v239 = vadd.f32 %v192, %v225
  %v240 = vadd.f32 %v193, %v226
  %v241 = vadd.f32 %v194, %v227
  %v242 = vadd.f32 %v195, %v228
  %v244 = vlaneseq
  %v245 = vshrl.u32 %v244, 7
  %v246 = vsub.s32 0, %v245
  %v247 = vrot.slane %v144, %v246
  %v248 = vlaneseq
  %v249 = vshrl.u32 %v248, 7
  %v250 = vsub.s32 4, %v249
  %v251 = vrot.slane %v144, %v250
  %v254 = vlaneseq
  %v255 = vshrl.u32 %v254, 7
  %v256 = vsub.s32 0, %v255
  %v257 = vrot.slane %v247, %v256
  %v258 = vlaneseq
  %v259 = vshrl.u32 %v258, 7
  %v260 = vsub.s32 0, %v259
  %v261 = vrot.slane %v251, %v260
  %v262 = vmul.f32 %v149, %v257
  %v263 = vmul.f32 %v150, %v261
  %v264 = vmul.f32 %v151, %v257
  %v265 = vmul.f32 %v152, %v261
  %v266 = vmul.f32 %v153, %v257
  %v267 = vmul.f32 %v154, %v261
  %v268 = vmul.f32 %v155, %v257
  %v269 = vmul.f32 %v156, %v261
  %v270 = vmul.f32 %v157, %v257
  %v271 = vmul.f32 %v158, %v261
  %v272 = vmul.f32 %v159, %v257
  %v273 = vmul.f32 %v160, %v261
  %v274 = vmul.f32 %v161, %v257
  %v275 = vmul.f32 %v162, %v261
  %v276 = vadd.f32 %v229, %v262
  %v277 = vadd.f32 %v230, %v263
  %v278 = vadd.f32 %v231, %v264
  %v279 = vadd.f32 %v232, %v265
  %v280 = vadd.f32 %v233, %v266
  %v281 = vadd.f32 %v234, %v267
  %v282 = vadd.f32 %v235, %v268
  %v283 = vadd.f32 %v236, %v269
  %v284 = vadd.f32 %v237, %v270
  %v285 = vadd.f32 %v238, %v271
  %v286 = vadd.f32 %v239, %v272
  %v287 = vadd.f32 %v240, %v273
  %v288 = vadd.f32 %v241, %v274
  %v289 = vadd.f32 %v242, %v275
  %v290 = vld [vmem:[#allocation2] sm:$0xfe]
  %v291 = vld [vmem:[#allocation2 + $0x8] sm:$0xfe]
  %v292 = vld [vmem:[#allocation2 + $0x20] sm:$0xfe]
  %v293 = vld [vmem:[#allocation2 + $0x28] sm:$0xfe]
  %v294 = vld [vmem:[#allocation2 + $0x40] sm:$0xfe]
  %v295 = vld [vmem:[#allocation2 + $0x48] sm:$0xfe]
  %v296 = vld [vmem:[#allocation2 + $0x60] sm:$0xfe]
  %v297 = vld [vmem:[#allocation2 + $0x68] sm:$0xfe]
  %v298 = vld [vmem:[#allocation2 + $0x80] sm:$0xfe]
  %v299 = vld [vmem:[#allocation2 + $0x88] sm:$0xfe]
  %v300 = vld [vmem:[#allocation2 + $0xa0] sm:$0xfe]
  %v301 = vld [vmem:[#allocation2 + $0xa8] sm:$0xfe]
  %v302 = vld [vmem:[#allocation2 + $0xc0] sm:$0xfe]
  %v303 = vld [vmem:[#allocation2 + $0xc8] sm:$0xfe]
  %v304 = vld [vmem:[#allocation2 + $0xe0] sm:$0xfe]
  %v305 = vld [vmem:[#allocation2 + $0xe8] sm:$0xfe]
  %v306 = vld [vmem:[#allocation2 + $0x100] sm:$0xfe]
  %v307 = vld [vmem:[#allocation2 + $0x108] sm:$0xfe]
  %v308 = vlaneseq
  %v309 = vshrl.u32 %v308, 7
  %v310 = vsub.s32 1, %v309
  %v311 = vrot.slane %v142, %v310
  %v312 = vlaneseq
  %v313 = vshrl.u32 %v312, 7
  %v314 = vsub.s32 5, %v313
  %v315 = vrot.slane %v142, %v314
  %v318 = vlaneseq
  %v319 = vshrl.u32 %v318, 7
  %v320 = vsub.s32 1, %v319
  %v321 = vrot.slane %v311, %v320
  %v322 = vlaneseq
  %v323 = vshrl.u32 %v322, 7
  %v324 = vsub.s32 1, %v323
  %v325 = vrot.slane %v315, %v324
  %v326 = vmul.f32 %v290, %v321
  %v327 = vmul.f32 %v291, %v325
  %v328 = vmul.f32 %v292, %v321
  %v329 = vmul.f32 %v293, %v325
  %v330 = vmul.f32 %v294, %v321
  %v331 = vmul.f32 %v295, %v325
  %v332 = vmul.f32 %v296, %v321
  %v333 = vmul.f32 %v297, %v325
  %v334 = vmul.f32 %v298, %v321
  %v335 = vmul.f32 %v299, %v325
  %v336 = vmul.f32 %v300, %v321
  %v337 = vmul.f32 %v301, %v325
  %v338 = vmul.f32 %v302, %v321
  %v339 = vmul.f32 %v303, %v325
  %v354 = vrot.slane %v326, 1
  %v355 = vrot.slane %v327, 1
  %v356 = vrot.slane %v328, 1
  %v357 = vrot.slane %v329, 1
  %v358 = vrot.slane %v330, 1
  %v359 = vrot.slane %v331, 1
  %v360 = vrot.slane %v332, 1
  %v361 = vrot.slane %v333, 1
  %v362 = vrot.slane %v334, 1
  %v363 = vrot.slane %v335, 1
  %v364 = vrot.slane %v336, 1
  %v365 = vrot.slane %v337, 1
  %v366 = vrot.slane %v338, 1
  %v367 = vrot.slane %v339, 1
  %v382 = vadd.f32 %v276, %v354
  %v383 = vadd.f32 %v277, %v355
  %v384 = vadd.f32 %v278, %v356
  %v385 = vadd.f32 %v279, %v357
  %v386 = vadd.f32 %v280, %v358
  %v387 = vadd.f32 %v281, %v359
  %v388 = vadd.f32 %v282, %v360
  %v389 = vadd.f32 %v283, %v361
  %v390 = vadd.f32 %v284, %v362
  %v391 = vadd.f32 %v285, %v363
  %v392 = vadd.f32 %v286, %v364
  %v393 = vadd.f32 %v287, %v365
  %v394 = vadd.f32 %v288, %v366
  %v395 = vadd.f32 %v289, %v367
  %v396 = vlaneseq
  %v397 = vshrl.u32 %v396, 7
  %v398 = vsub.s32 1, %v397
  %v399 = vrot.slane %v143, %v398
  %v400 = vlaneseq
  %v401 = vshrl.u32 %v400, 7
  %v402 = vsub.s32 5, %v401
  %v403 = vrot.slane %v143, %v402
  %v406 = vlaneseq
  %v407 = vshrl.u32 %v406, 7
  %v408 = vsub.s32 1, %v407
  %v409 = vrot.slane %v399, %v408
  %v410 = vlaneseq
  %v411 = vshrl.u32 %v410, 7
  %v412 = vsub.s32 1, %v411
  %v413 = vrot.slane %v403, %v412
  %v414 = vmul.f32 %v292, %v409
  %v415 = vmul.f32 %v293, %v413
  %v416 = vmul.f32 %v294, %v409
  %v417 = vmul.f32 %v295, %v413
  %v418 = vmul.f32 %v296, %v409
  %v419 = vmul.f32 %v297, %v413
  %v420 = vmul.f32 %v298, %v409
  %v421 = vmul.f32 %v299, %v413
  %v422 = vmul.f32 %v300, %v409
  %v423 = vmul.f32 %v301, %v413
  %v424 = vmul.f32 %v302, %v409
  %v425 = vmul.f32 %v303, %v413
  %v426 = vmul.f32 %v304, %v409
  %v427 = vmul.f32 %v305, %v413
  %v442 = vrot.slane %v414, 1
  %v443 = vrot.slane %v415, 1
  %v444 = vrot.slane %v416, 1
  %v445 = vrot.slane %v417, 1
  %v446 = vrot.slane %v418, 1
  %v447 = vrot.slane %v419, 1
  %v448 = vrot.slane %v420, 1
  %v449 = vrot.slane %v421, 1
  %v450 = vrot.slane %v422, 1
  %v451 = vrot.slane %v423, 1
  %v452 = vrot.slane %v424, 1
  %v453 = vrot.slane %v425, 1
  %v454 = vrot.slane %v426, 1
  %v455 = vrot.slane %v427, 1
  %v470 = vadd.f32 %v382, %v442
  %v471 = vadd.f32 %v383, %v443
  %v472 = vadd.f32 %v384, %v444
  %v473 = vadd.f32 %v385, %v445
  %v474 = vadd.f32 %v386, %v446
  %v475 = vadd.f32 %v387, %v447
  %v476 = vadd.f32 %v388, %v448
  %v477 = vadd.f32 %v389, %v449
  %v478 = vadd.f32 %v390, %v450
  %v479 = vadd.f32 %v391, %v451
  %v480 = vadd.f32 %v392, %v452
  %v481 = vadd.f32 %v393, %v453
  %v482 = vadd.f32 %v394, %v454
  %v483 = vadd.f32 %v395, %v455
  %v484 = vlaneseq
  %v485 = vshrl.u32 %v484, 7
  %v486 = vsub.s32 1, %v485
  %v487 = vrot.slane %v144, %v486
  %v488 = vlaneseq
  %v489 = vshrl.u32 %v488, 7
  %v490 = vsub.s32 5, %v489
  %v491 = vrot.slane %v144, %v490
  %v494 = vlaneseq
  %v495 = vshrl.u32 %v494, 7
  %v496 = vsub.s32 1, %v495
  %v497 = vrot.slane %v487, %v496
  %v498 = vlaneseq
  %v499 = vshrl.u32 %v498, 7
  %v500 = vsub.s32 1, %v499
  %v501 = vrot.slane %v491, %v500
  %v502 = vmul.f32 %v294, %v497
  %v503 = vmul.f32 %v295, %v501
  %v504 = vmul.f32 %v296, %v497
  %v505 = vmul.f32 %v297, %v501
  %v506 = vmul.f32 %v298, %v497
  %v507 = vmul.f32 %v299, %v501
  %v508 = vmul.f32 %v300, %v497
  %v509 = vmul.f32 %v301, %v501
  %v510 = vmul.f32 %v302, %v497
  %v511 = vmul.f32 %v303, %v501
  %v512 = vmul.f32 %v304, %v497
  %v513 = vmul.f32 %v305, %v501
  %v514 = vmul.f32 %v306, %v497
  %v515 = vmul.f32 %v307, %v501
  %v530 = vrot.slane %v502, 1
  %v531 = vrot.slane %v503, 1
  %v532 = vrot.slane %v504, 1
  %v533 = vrot.slane %v505, 1
  %v534 = vrot.slane %v506, 1
  %v535 = vrot.slane %v507, 1
  %v536 = vrot.slane %v508, 1
  %v537 = vrot.slane %v509, 1
  %v538 = vrot.slane %v510, 1
  %v539 = vrot.slane %v511, 1
  %v540 = vrot.slane %v512, 1
  %v541 = vrot.slane %v513, 1
  %v542 = vrot.slane %v514, 1
  %v543 = vrot.slane %v515, 1
  %v558 = vadd.f32 %v470, %v530
  %v559 = vadd.f32 %v471, %v531
  %v560 = vadd.f32 %v472, %v532
  %v561 = vadd.f32 %v473, %v533
  %v562 = vadd.f32 %v474, %v534
  %v563 = vadd.f32 %v475, %v535
  %v564 = vadd.f32 %v476, %v536
  %v565 = vadd.f32 %v477, %v537
  %v566 = vadd.f32 %v478, %v538
  %v567 = vadd.f32 %v479, %v539
  %v568 = vadd.f32 %v480, %v540
  %v569 = vadd.f32 %v481, %v541
  %v570 = vadd.f32 %v482, %v542
  %v571 = vadd.f32 %v483, %v543
  %v572 = vld [vmem:[#allocation2] sm:$0xfc]
  %v573 = vld [vmem:[#allocation2 + $0x8] sm:$0xfc]
  %v574 = vld [vmem:[#allocation2 + $0x10] sm:$0x1]
  %v575 = vld [vmem:[#allocation2 + $0x18] sm:$0x1]
  %v576 = vld [vmem:[#allocation2 + $0x20] sm:$0xfc]
  %v577 = vld [vmem:[#allocation2 + $0x28] sm:$0xfc]
  %v578 = vld [vmem:[#allocation2 + $0x30] sm:$0x1]
  %v579 = vld [vmem:[#allocation2 + $0x38] sm:$0x1]
  %v580 = vld [vmem:[#allocation2 + $0x40] sm:$0xfc]
  %v581 = vld [vmem:[#allocation2 + $0x48] sm:$0xfc]
  %v582 = vld [vmem:[#allocation2 + $0x50] sm:$0x1]
  %v583 = vld [vmem:[#allocation2 + $0x58] sm:$0x1]
  %v584 = vld [vmem:[#allocation2 + $0x60] sm:$0xfc]
  %v585 = vld [vmem:[#allocation2 + $0x68] sm:$0xfc]
  %v586 = vld [vmem:[#allocation2 + $0x70] sm:$0x1]
  %v587 = vld [vmem:[#allocation2 + $0x78] sm:$0x1]
  %v588 = vld [vmem:[#allocation2 + $0x80] sm:$0xfc]
  %v589 = vld [vmem:[#allocation2 + $0x88] sm:$0xfc]
  %v590 = vld [vmem:[#allocation2 + $0x90] sm:$0x1]
  %v591 = vld [vmem:[#allocation2 + $0x98] sm:$0x1]
  %v592 = vld [vmem:[#allocation2 + $0xa0] sm:$0xfc]
  %v593 = vld [vmem:[#allocation2 + $0xa8] sm:$0xfc]
  %v594 = vld [vmem:[#allocation2 + $0xb0] sm:$0x1]
  %v595 = vld [vmem:[#allocation2 + $0xb8] sm:$0x1]
  %v596 = vld [vmem:[#allocation2 + $0xc0] sm:$0xfc]
  %v597 = vld [vmem:[#allocation2 + $0xc8] sm:$0xfc]
  %v598 = vld [vmem:[#allocation2 + $0xd0] sm:$0x1]
  %v599 = vld [vmem:[#allocation2 + $0xd8] sm:$0x1]
  %v600 = vld [vmem:[#allocation2 + $0xe0] sm:$0xfc]
  %v601 = vld [vmem:[#allocation2 + $0xe8] sm:$0xfc]
  %v602 = vld [vmem:[#allocation2 + $0xf0] sm:$0x1]
  %v603 = vld [vmem:[#allocation2 + $0xf8] sm:$0x1]
  %v604 = vld [vmem:[#allocation2 + $0x100] sm:$0xfc]
  %v605 = vld [vmem:[#allocation2 + $0x108] sm:$0xfc]
  %v606 = vld [vmem:[#allocation2 + $0x110] sm:$0x1]
  %v607 = vld [vmem:[#allocation2 + $0x118] sm:$0x1]
  %v608 = vlaneseq
  %v609 = vshrl.u32 %v608, 7
  %v610 = vsub.s32 2, %v609
  %v611 = vrot.slane %v142, %v610
  %v612 = vlaneseq
  %v613 = vshrl.u32 %v612, 7
  %v614 = vsub.s32 6, %v613
  %v615 = vrot.slane %v142, %v614
  %v618 = vlaneseq
  %v619 = vshrl.u32 %v618, 7
  %v620 = vsub.s32 2, %v619
  %v621 = vrot.slane %v611, %v620
  %v622 = vlaneseq
  %v623 = vshrl.u32 %v622, 7
  %v624 = vsub.s32 2, %v623
  %v625 = vrot.slane %v615, %v624
  %v626 = vmul.f32 %v572, %v621
  %v627 = vmul.f32 %v573, %v625
  %v628 = vmul.f32 %v574, %v621
  %v629 = vmul.f32 %v575, %v625
  %v630 = vmul.f32 %v576, %v621
  %v631 = vmul.f32 %v577, %v625
  %v632 = vmul.f32 %v578, %v621
  %v633 = vmul.f32 %v579, %v625
  %v634 = vmul.f32 %v580, %v621
  %v635 = vmul.f32 %v581, %v625
  %v636 = vmul.f32 %v582, %v621
  %v637 = vmul.f32 %v583, %v625
  %v638 = vmul.f32 %v584, %v621
  %v639 = vmul.f32 %v585, %v625
  %v640 = vmul.f32 %v586, %v621
  %v641 = vmul.f32 %v587, %v625
  %v642 = vmul.f32 %v588, %v621
  %v643 = vmul.f32 %v589, %v625
  %v644 = vmul.f32 %v590, %v621
  %v645 = vmul.f32 %v591, %v625
  %v646 = vmul.f32 %v592, %v621
  %v647 = vmul.f32 %v593, %v625
  %v648 = vmul.f32 %v594, %v621
  %v649 = vmul.f32 %v595, %v625
  %v650 = vmul.f32 %v596, %v621
  %v651 = vmul.f32 %v597, %v625
  %v652 = vmul.f32 %v598, %v621
  %v653 = vmul.f32 %v599, %v625
  %vm682 = vcmask 1045504
  %v683 = vrot.slane %v626, 2
  %v684 = vrot.slane %v628, 2
  %v685 = vsel %vm682, %v683, %v684
  %v686 = vrot.slane %v627, 2
  %v687 = vrot.slane %v629, 2
  %v688 = vsel %vm682, %v686, %v687
  %v689 = vrot.slane %v630, 2
  %v690 = vrot.slane %v632, 2
  %v691 = vsel %vm682, %v689, %v690
  %v692 = vrot.slane %v631, 2
  %v693 = vrot.slane %v633, 2
  %v694 = vsel %vm682, %v692, %v693
  %v695 = vrot.slane %v634, 2
  %v696 = vrot.slane %v636, 2
  %v697 = vsel %vm682, %v695, %v696
  %v698 = vrot.slane %v635, 2
  %v699 = vrot.slane %v637, 2
  %v700 = vsel %vm682, %v698, %v699
  %v701 = vrot.slane %v638, 2
  %v702 = vrot.slane %v640, 2
  %v703 = vsel %vm682, %v701, %v702
  %v704 = vrot.slane %v639, 2
  %v705 = vrot.slane %v641, 2
  %v706 = vsel %vm682, %v704, %v705
  %v707 = vrot.slane %v642, 2
  %v708 = vrot.slane %v644, 2
  %v709 = vsel %vm682, %v707, %v708
  %v710 = vrot.slane %v643, 2
  %v711 = vrot.slane %v645, 2
  %v712 = vsel %vm682, %v710, %v711
  %v713 = vrot.slane %v646, 2
  %v714 = vrot.slane %v648, 2
  %v715 = vsel %vm682, %v713, %v714
  %v716 = vrot.slane %v647, 2
  %v717 = vrot.slane %v649, 2
  %v718 = vsel %vm682, %v716, %v717
  %v719 = vrot.slane %v650, 2
  %v720 = vrot.slane %v652, 2
  %v721 = vsel %vm682, %v719, %v720
  %v722 = vrot.slane %v651, 2
  %v723 = vrot.slane %v653, 2
  %v724 = vsel %vm682, %v722, %v723
  %v739 = vadd.f32 %v558, %v685
  %v740 = vadd.f32 %v559, %v688
  %v741 = vadd.f32 %v560, %v691
  %v742 = vadd.f32 %v561, %v694
  %v743 = vadd.f32 %v562, %v697
  %v744 = vadd.f32 %v563, %v700
  %v745 = vadd.f32 %v564, %v703
  %v746 = vadd.f32 %v565, %v706
  %v747 = vadd.f32 %v566, %v709
  %v748 = vadd.f32 %v567, %v712
  %v749 = vadd.f32 %v568, %v715
  %v750 = vadd.f32 %v569, %v718
  %v751 = vadd.f32 %v570, %v721
  %v752 = vadd.f32 %v571, %v724
  %v753 = vlaneseq
  %v754 = vshrl.u32 %v753, 7
  %v755 = vsub.s32 2, %v754
  %v756 = vrot.slane %v143, %v755
  %v757 = vlaneseq
  %v758 = vshrl.u32 %v757, 7
  %v759 = vsub.s32 6, %v758
  %v760 = vrot.slane %v143, %v759
  %v763 = vlaneseq
  %v764 = vshrl.u32 %v763, 7
  %v765 = vsub.s32 2, %v764
  %v766 = vrot.slane %v756, %v765
  %v767 = vlaneseq
  %v768 = vshrl.u32 %v767, 7
  %v769 = vsub.s32 2, %v768
  %v770 = vrot.slane %v760, %v769
  %v771 = vmul.f32 %v576, %v766
  %v772 = vmul.f32 %v577, %v770
  %v773 = vmul.f32 %v578, %v766
  %v774 = vmul.f32 %v579, %v770
  %v775 = vmul.f32 %v580, %v766
  %v776 = vmul.f32 %v581, %v770
  %v777 = vmul.f32 %v582, %v766
  %v778 = vmul.f32 %v583, %v770
  %v779 = vmul.f32 %v584, %v766
  %v780 = vmul.f32 %v585, %v770
  %v781 = vmul.f32 %v586, %v766
  %v782 = vmul.f32 %v587, %v770
  %v783 = vmul.f32 %v588, %v766
  %v784 = vmul.f32 %v589, %v770
  %v785 = vmul.f32 %v590, %v766
  %v786 = vmul.f32 %v591, %v770
  %v787 = vmul.f32 %v592, %v766
  %v788 = vmul.f32 %v593, %v770
  %v789 = vmul.f32 %v594, %v766
  %v790 = vmul.f32 %v595, %v770
  %v791 = vmul.f32 %v596, %v766
  %v792 = vmul.f32 %v597, %v770
  %v793 = vmul.f32 %v598, %v766
  %v794 = vmul.f32 %v599, %v770
  %v795 = vmul.f32 %v600, %v766
  %v796 = vmul.f32 %v601, %v770
  %v797 = vmul.f32 %v602, %v766
  %v798 = vmul.f32 %v603, %v770
  %v827 = vrot.slane %v771, 2
  %v828 = vrot.slane %v773, 2
  %v829 = vsel %vm682, %v827, %v828
  %v830 = vrot.slane %v772, 2
  %v831 = vrot.slane %v774, 2
  %v832 = vsel %vm682, %v830, %v831
  %v833 = vrot.slane %v775, 2
  %v834 = vrot.slane %v777, 2
  %v835 = vsel %vm682, %v833, %v834
  %v836 = vrot.slane %v776, 2
  %v837 = vrot.slane %v778, 2
  %v838 = vsel %vm682, %v836, %v837
  %v839 = vrot.slane %v779, 2
  %v840 = vrot.slane %v781, 2
  %v841 = vsel %vm682, %v839, %v840
  %v842 = vrot.slane %v780, 2
  %v843 = vrot.slane %v782, 2
  %v844 = vsel %vm682, %v842, %v843
  %v845 = vrot.slane %v783, 2
  %v846 = vrot.slane %v785, 2
  %v847 = vsel %vm682, %v845, %v846
  %v848 = vrot.slane %v784, 2
  %v849 = vrot.slane %v786, 2
  %v850 = vsel %vm682, %v848, %v849
  %v851 = vrot.slane %v787, 2
  %v852 = vrot.slane %v789, 2
  %v853 = vsel %vm682, %v851, %v852
  %v854 = vrot.slane %v788, 2
  %v855 = vrot.slane %v790, 2
  %v856 = vsel %vm682, %v854, %v855
  %v857 = vrot.slane %v791, 2
  %v858 = vrot.slane %v793, 2
  %v859 = vsel %vm682, %v857, %v858
  %v860 = vrot.slane %v792, 2
  %v861 = vrot.slane %v794, 2
  %v862 = vsel %vm682, %v860, %v861
  %v863 = vrot.slane %v795, 2
  %v864 = vrot.slane %v797, 2
  %v865 = vsel %vm682, %v863, %v864
  %v866 = vrot.slane %v796, 2
  %v867 = vrot.slane %v798, 2
  %v868 = vsel %vm682, %v866, %v867
  %v883 = vadd.f32 %v739, %v829
  %v884 = vadd.f32 %v740, %v832
  %v885 = vadd.f32 %v741, %v835
  %v886 = vadd.f32 %v742, %v838
  %v887 = vadd.f32 %v743, %v841
  %v888 = vadd.f32 %v744, %v844
  %v889 = vadd.f32 %v745, %v847
  %v890 = vadd.f32 %v746, %v850
  %v891 = vadd.f32 %v747, %v853
  %v892 = vadd.f32 %v748, %v856
  %v893 = vadd.f32 %v749, %v859
  %v894 = vadd.f32 %v750, %v862
  %v895 = vadd.f32 %v751, %v865
  %v896 = vadd.f32 %v752, %v868
  %v897 = vlaneseq
  %v898 = vshrl.u32 %v897, 7
  %v899 = vsub.s32 2, %v898
  %v900 = vrot.slane %v144, %v899
  %v901 = vlaneseq
  %v902 = vshrl.u32 %v901, 7
  %v903 = vsub.s32 6, %v902
  %v904 = vrot.slane %v144, %v903
  %v907 = vlaneseq
  %v908 = vshrl.u32 %v907, 7
  %v909 = vsub.s32 2, %v908
  %v910 = vrot.slane %v900, %v909
  %v911 = vlaneseq
  %v912 = vshrl.u32 %v911, 7
  %v913 = vsub.s32 2, %v912
  %v914 = vrot.slane %v904, %v913
  %v915 = vmul.f32 %v580, %v910
  %v916 = vmul.f32 %v581, %v914
  %v917 = vmul.f32 %v582, %v910
  %v918 = vmul.f32 %v583, %v914
  %v919 = vmul.f32 %v584, %v910
  %v920 = vmul.f32 %v585, %v914
  %v921 = vmul.f32 %v586, %v910
  %v922 = vmul.f32 %v587, %v914
  %v923 = vmul.f32 %v588, %v910
  %v924 = vmul.f32 %v589, %v914
  %v925 = vmul.f32 %v590, %v910
  %v926 = vmul.f32 %v591, %v914
  %v927 = vmul.f32 %v592, %v910
  %v928 = vmul.f32 %v593, %v914
  %v929 = vmul.f32 %v594, %v910
  %v930 = vmul.f32 %v595, %v914
  %v931 = vmul.f32 %v596, %v910
  %v932 = vmul.f32 %v597, %v914
  %v933 = vmul.f32 %v598, %v910
  %v934 = vmul.f32 %v599, %v914
  %v935 = vmul.f32 %v600, %v910
  %v936 = vmul.f32 %v601, %v914
  %v937 = vmul.f32 %v602, %v910
  %v938 = vmul.f32 %v603, %v914
  %v939 = vmul.f32 %v604, %v910
  %v940 = vmul.f32 %v605, %v914
  %v941 = vmul.f32 %v606, %v910
  %v942 = vmul.f32 %v607, %v914
  %v971 = vrot.slane %v915, 2
  %v972 = vrot.slane %v917, 2
  %v973 = vsel %vm682, %v971, %v972
  %v974 = vrot.slane %v916, 2
  %v975 = vrot.slane %v918, 2
  %v976 = vsel %vm682, %v974, %v975
  %v977 = vrot.slane %v919, 2
  %v978 = vrot.slane %v921, 2
  %v979 = vsel %vm682, %v977, %v978
  %v980 = vrot.slane %v920, 2
  %v981 = vrot.slane %v922, 2
  %v982 = vsel %vm682, %v980, %v981
  %v983 = vrot.slane %v923, 2
  %v984 = vrot.slane %v925, 2
  %v985 = vsel %vm682, %v983, %v984
  %v986 = vrot.slane %v924, 2
  %v987 = vrot.slane %v926, 2
  %v988 = vsel %vm682, %v986, %v987
  %v989 = vrot.slane %v927, 2
  %v990 = vrot.slane %v929, 2
  %v991 = vsel %vm682, %v989, %v990
  %v992 = vrot.slane %v928, 2
  %v993 = vrot.slane %v930, 2
  %v994 = vsel %vm682, %v992, %v993
  %v995 = vrot.slane %v931, 2
  %v996 = vrot.slane %v933, 2
  %v997 = vsel %vm682, %v995, %v996
  %v998 = vrot.slane %v932, 2
  %v999 = vrot.slane %v934, 2
  %v1000 = vsel %vm682, %v998, %v999
  %v1001 = vrot.slane %v935, 2
  %v1002 = vrot.slane %v937, 2
  %v1003 = vsel %vm682, %v1001, %v1002
  %v1004 = vrot.slane %v936, 2
  %v1005 = vrot.slane %v938, 2
  %v1006 = vsel %vm682, %v1004, %v1005
  %v1007 = vrot.slane %v939, 2
  %v1008 = vrot.slane %v941, 2
  %v1009 = vsel %vm682, %v1007, %v1008
  %v1010 = vrot.slane %v940, 2
  %v1011 = vrot.slane %v942, 2
  %v1012 = vsel %vm682, %v1010, %v1011
  %v1027 = vadd.f32 %v883, %v973
  %v1028 = vadd.f32 %v884, %v976
  %v1029 = vadd.f32 %v885, %v979
  %v1030 = vadd.f32 %v886, %v982
  %v1031 = vadd.f32 %v887, %v985
  %v1032 = vadd.f32 %v888, %v988
  %v1033 = vadd.f32 %v889, %v991
  %v1034 = vadd.f32 %v890, %v994
  %v1035 = vadd.f32 %v891, %v997
  %v1036 = vadd.f32 %v892, %v1000
  %v1037 = vadd.f32 %v893, %v1003
  %v1038 = vadd.f32 %v894, %v1006
  %v1039 = vadd.f32 %v895, %v1009
  %v1040 = vadd.f32 %v896, %v1012
  %1041 = vst [vmem:[#allocation3] sm:$0x7f] %v1027
  %1042 = vst [vmem:[#allocation3 + $0x8] sm:$0x7f] %v1028
  %1043 = vst [vmem:[#allocation3 + $0x10] sm:$0x7f] %v1029
  %1044 = vst [vmem:[#allocation3 + $0x18] sm:$0x7f] %v1030
  %1045 = vst [vmem:[#allocation3 + $0x20] sm:$0x7f] %v1031
  %1046 = vst [vmem:[#allocation3 + $0x28] sm:$0x7f] %v1032
  %1047 = vst [vmem:[#allocation3 + $0x30] sm:$0x7f] %v1033
  %1048 = vst [vmem:[#allocation3 + $0x38] sm:$0x7f] %v1034
  %1049 = vst [vmem:[#allocation3 + $0x40] sm:$0x7f] %v1035
  %1050 = vst [vmem:[#allocation3 + $0x48] sm:$0x7f] %v1036
  %1051 = vst [vmem:[#allocation3 + $0x50] sm:$0x7f] %v1037
  %1052 = vst [vmem:[#allocation3 + $0x58] sm:$0x7f] %v1038
  %1053 = vst [vmem:[#allocation3 + $0x60] sm:$0x7f] %v1039
  %1054 = vst [vmem:[#allocation3 + $0x68] sm:$0x7f] %v1040
  %v1055 = vld [vmem:[#allocation3] sm:$0x7f]
  %v1056 = vld [vmem:[#allocation3 + $0x8] sm:$0x7f]
  %v1057 = vld [vmem:[#allocation3 + $0x10] sm:$0x7f]
  %v1058 = vld [vmem:[#allocation3 + $0x18] sm:$0x7f]
  %v1059 = vld [vmem:[#allocation3 + $0x20] sm:$0x7f]
  %v1060 = vld [vmem:[#allocation3 + $0x28] sm:$0x7f]
  %v1061 = vld [vmem:[#allocation3 + $0x30] sm:$0x7f]
  %v1062 = vld [vmem:[#allocation3 + $0x38] sm:$0x7f]
  %v1063 = vld [vmem:[#allocation3 + $0x40] sm:$0x7f]
  %v1064 = vld [vmem:[#allocation3 + $0x48] sm:$0x7f]
  %v1065 = vld [vmem:[#allocation3 + $0x50] sm:$0x7f]
  %v1066 = vld [vmem:[#allocation3 + $0x58] sm:$0x7f]
  %v1067 = vld [vmem:[#allocation3 + $0x60] sm:$0x7f]
  %v1068 = vld [vmem:[#allocation3 + $0x68] sm:$0x7f]
  %vm1069 = vcmask 1046528
  %v1070 = vsel %vm1069, %v1055, 0.0
  %v1071 = vsel %vm1069, %v1057, 0.0
  %v1072 = vadd.f32 %v1070, %v1071
  %v1073 = vsel %vm1069, %v1059, 0.0
  %v1074 = vadd.f32 %v1072, %v1073
  %v1075 = vsel %vm1069, %v1061, 0.0
  %v1076 = vadd.f32 %v1074, %v1075
  %v1077 = vsel %vm1069, %v1063, 0.0
  %v1078 = vadd.f32 %v1076, %v1077
  %v1079 = vsel %vm1069, %v1065, 0.0
  %v1080 = vadd.f32 %v1078, %v1079
  %v1081 = vsel %vm1069, %v1067, 0.0
  %v1082 = vadd.f32 %v1080, %v1081
  %v1083 = vrot.slane %v1082, 4
  %v1084 = vadd.f32 %v1082, %v1083
  %v1085 = vrot.slane %v1084, 2
  %v1086 = vadd.f32 %v1084, %v1085
  %v1087 = vrot.slane %v1086, 1
  %v1088 = vadd.f32 %v1086, %v1087
  %v1089 = vsel %vm1069, %v1056, 0.0
  %v1090 = vsel %vm1069, %v1058, 0.0
  %v1091 = vadd.f32 %v1089, %v1090
  %v1092 = vsel %vm1069, %v1060, 0.0
  %v1093 = vadd.f32 %v1091, %v1092
  %v1094 = vsel %vm1069, %v1062, 0.0
  %v1095 = vadd.f32 %v1093, %v1094
  %v1096 = vsel %vm1069, %v1064, 0.0
  %v1097 = vadd.f32 %v1095, %v1096
  %v1098 = vsel %vm1069, %v1066, 0.0
  %v1099 = vadd.f32 %v1097, %v1098
  %v1100 = vsel %vm1069, %v1068, 0.0
  %v1101 = vadd.f32 %v1099, %v1100
  %v1102 = vrot.slane %v1101, 4
  %v1103 = vadd.f32 %v1101, %v1102
  %v1104 = vrot.slane %v1103, 2
  %v1105 = vadd.f32 %v1103, %v1104
  %v1106 = vrot.slane %v1105, 1
  %v1107 = vadd.f32 %v1105, %v1106
  %v1108 = vmul.f32 %v1088, 0.020408163
  %v1109 = vmul.f32 %v1107, 0.020408163
  %v1110 = vsub.f32 %v1055, %v1108
  %v1111 = vsub.f32 %v1056, %v1109
  %v1112 = vsub.f32 %v1057, %v1108
  %v1113 = vsub.f32 %v1058, %v1109
  %v1114 = vsub.f32 %v1059, %v1108
  %v1115 = vsub.f32 %v1060, %v1109
  %v1116 = vsub.f32 %v1061, %v1108
  %v1117 = vsub.f32 %v1062, %v1109
  %v1118 = vsub.f32 %v1063, %v1108
  %v1119 = vsub.f32 %v1064, %v1109
  %v1120 = vsub.f32 %v1065, %v1108
  %v1121 = vsub.f32 %v1066, %v1109
  %v1122 = vsub.f32 %v1067, %v1108
  %v1123 = vsub.f32 %v1068, %v1109
  %v1124 = vmul.f32 %v1110, %v1110
  %v1125 = vmul.f32 %v1111, %v1111
  %v1126 = vmul.f32 %v1112, %v1112
  %v1127 = vmul.f32 %v1113, %v1113
  %v1128 = vmul.f32 %v1114, %v1114
  %v1129 = vmul.f32 %v1115, %v1115
  %v1130 = vmul.f32 %v1116, %v1116
  %v1131 = vmul.f32 %v1117, %v1117
  %v1132 = vmul.f32 %v1118, %v1118
  %v1133 = vmul.f32 %v1119, %v1119
  %v1134 = vmul.f32 %v1120, %v1120
  %v1135 = vmul.f32 %v1121, %v1121
  %v1136 = vmul.f32 %v1122, %v1122
  %v1137 = vmul.f32 %v1123, %v1123
  %v1138 = vsel %vm1069, %v1124, 0.0
  %v1139 = vsel %vm1069, %v1126, 0.0
  %v1140 = vadd.f32 %v1138, %v1139
  %v1141 = vsel %vm1069, %v1128, 0.0
  %v1142 = vadd.f32 %v1140, %v1141
  %v1143 = vsel %vm1069, %v1130, 0.0
  %v1144 = vadd.f32 %v1142, %v1143
  %v1145 = vsel %vm1069, %v1132, 0.0
  %v1146 = vadd.f32 %v1144, %v1145
  %v1147 = vsel %vm1069, %v1134, 0.0
  %v1148 = vadd.f32 %v1146, %v1147
  %v1149 = vsel %vm1069, %v1136, 0.0
  %v1150 = vadd.f32 %v1148, %v1149
  %v1151 = vrot.slane %v1150, 4
  %v1152 = vadd.f32 %v1150, %v1151
  %v1153 = vrot.slane %v1152, 2
  %v1154 = vadd.f32 %v1152, %v1153
  %v1155 = vrot.slane %v1154, 1
  %v1156 = vadd.f32 %v1154, %v1155
  %v1157 = vsel %vm1069, %v1125, 0.0
  %v1158 = vsel %vm1069, %v1127, 0.0
  %v1159 = vadd.f32 %v1157, %v1158
  %v1160 = vsel %vm1069, %v1129, 0.0
  %v1161 = vadd.f32 %v1159, %v1160
  %v1162 = vsel %vm1069, %v1131, 0.0
  %v1163 = vadd.f32 %v1161, %v1162
  %v1164 = vsel %vm1069, %v1133, 0.0
  %v1165 = vadd.f32 %v1163, %v1164
  %v1166 = vsel %vm1069, %v1135, 0.0
  %v1167 = vadd.f32 %v1165, %v1166
  %v1168 = vsel %vm1069, %v1137, 0.0
  %v1169 = vadd.f32 %v1167, %v1168
  %v1170 = vrot.slane %v1169, 4
  %v1171 = vadd.f32 %v1169, %v1170
  %v1172 = vrot.slane %v1171, 2
  %v1173 = vadd.f32 %v1171, %v1172
  %v1174 = vrot.slane %v1173, 1
  %v1175 = vadd.f32 %v1173, %v1174
  %v1176 = vmul.f32 %v1156, 0.020408163
  %v1177 = vmul.f32 %v1175, 0.020408163
  %v1178 = vld [vmem:[%s2] sm:$0x3]
  %v1179 = vld [vmem:[%s3] sm:$0x3]
  %v1180 = vadd.f32 %v1176, 0.001
  %v1181 = vadd.f32 %v1177, 0.001
  %v1182 = vrsqrt.pop %v1180
  %v1183 = vrsqrt.pop %v1181
  %v1186 = vcombine.low %v1182, %v1183
  %v1188 = vunpack.c.l.s4 1966171168
  %v1189 = vunpack.c.0.s8 %v1188
  %v1190 = vlaneseq
  %v1191 = vshrl.u32 %v1190, 7
  %v1192 = vsub.s32 %v1189, %v1191
  %v1193 = vrot.slane %v1186, %v1192
  %v1195 = vunpack.c.l.s4 1966171168
  %v1196 = vunpack.c.0.s8 %v1195
  %v1197 = vlaneseq
  %v1198 = vshrl.u32 %v1197, 7
  %v1199 = vsub.s32 %v1196, %v1198
  %v1200 = vrot.slane %v1193, %v1199
  %v1202 = vmul.f32 %v1178, %v1200
  %v1204 = vlaneseq
  %v1205 = vshrl.u32 %v1204, 7
  %v1206 = vsub.s32 0, %v1205
  %v1207 = vrot.slane %v1202, %v1206
  %v1208 = vlaneseq
  %v1209 = vshrl.u32 %v1208, 7
  %v1210 = vsub.s32 1, %v1209
  %v1211 = vrot.slane %v1202, %v1210
  %v1214 = vmul.f32 %v1110, %v1207
  %v1215 = vmul.f32 %v1111, %v1211
  %v1216 = vmul.f32 %v1112, %v1207
  %v1217 = vmul.f32 %v1113, %v1211
  %v1218 = vmul.f32 %v1114, %v1207
  %v1219 = vmul.f32 %v1115, %v1211
  %v1220 = vmul.f32 %v1116, %v1207
  %v1221 = vmul.f32 %v1117, %v1211
  %v1222 = vmul.f32 %v1118, %v1207
  %v1223 = vmul.f32 %v1119, %v1211
  %v1224 = vmul.f32 %v1120, %v1207
  %v1225 = vmul.f32 %v1121, %v1211
  %v1226 = vmul.f32 %v1122, %v1207
  %v1227 = vmul.f32 %v1123, %v1211
  %v1229 = vlaneseq
  %v1230 = vshrl.u32 %v1229, 7
  %v1231 = vsub.s32 0, %v1230
  %v1232 = vrot.slane %v1179, %v1231
  %v1233 = vlaneseq
  %v1234 = vshrl.u32 %v1233, 7
  %v1235 = vsub.s32 1, %v1234
  %v1236 = vrot.slane %v1179, %v1235
  %v1239 = vadd.f32 %v1214, %v1232
  %v1240 = vadd.f32 %v1215, %v1236
  %v1241 = vadd.f32 %v1216, %v1232
  %v1242 = vadd.f32 %v1217, %v1236
  %v1243 = vadd.f32 %v1218, %v1232
  %v1244 = vadd.f32 %v1219, %v1236
  %v1245 = vadd.f32 %v1220, %v1232
  %v1246 = vadd.f32 %v1221, %v1236
  %v1247 = vadd.f32 %v1222, %v1232
  %v1248 = vadd.f32 %v1223, %v1236
  %v1249 = vadd.f32 %v1224, %v1232
  %v1250 = vadd.f32 %v1225, %v1236
  %v1251 = vadd.f32 %v1226, %v1232
  %v1252 = vadd.f32 %v1227, %v1236
  %1253 = vst [vmem:[%s4] sm:$0x7f] %v1239
  %1254 = vst [vmem:[%s4 + $0x8] sm:$0x7f] %v1240
  %1255 = vst [vmem:[%s4 + $0x10] sm:$0x7f] %v1241
  %1256 = vst [vmem:[%s4 + $0x18] sm:$0x7f] %v1242
  %1257 = vst [vmem:[%s4 + $0x20] sm:$0x7f] %v1243
  %1258 = vst [vmem:[%s4 + $0x28] sm:$0x7f] %v1244
  %1259 = vst [vmem:[%s4 + $0x30] sm:$0x7f] %v1245
  %1260 = vst [vmem:[%s4 + $0x38] sm:$0x7f] %v1246
  %1261 = vst [vmem:[%s4 + $0x40] sm:$0x7f] %v1247
  %1262 = vst [vmem:[%s4 + $0x48] sm:$0x7f] %v1248
  %1263 = vst [vmem:[%s4 + $0x50] sm:$0x7f] %v1249
  %1264 = vst [vmem:[%s4 + $0x58] sm:$0x7f] %v1250
  %1265 = vst [vmem:[%s4 + $0x60] sm:$0x7f] %v1251
  %1266 = vst [vmem:[%s4 + $0x68] sm:$0x7f] %v1252
  // Predicated region
  $region18: #{tpu_custom_call.1} parent=0 // pred_check
    _
  $region19: #{tpu_custom_call.1} parent=0 // pred_check_branch
    %1268 = sbr.rel (0) target = $region21
  $region20: #{tpu_custom_call.1} parent=0 // pred_region
    _
  $region21: #{tpu_custom_call.1} parent=0 // pred_fallthru
    _
  // Predicated region
  $region22: #{tpu_custom_call.1} parent=0 // pred_check
    _
  $region23: #{tpu_custom_call.1} parent=0 // pred_check_branch
    %1270 = sbr.rel (0) target = $region25
  $region24: #{tpu_custom_call.1} parent=0 // pred_region
    _
  $region25: #{tpu_custom_call.1} parent=0 // pred_fallthru
    _

</llo_original>
